<compile_context>
chip_gen: v5e
topology: v5e:2x2
jax: 0.10.0
libtpu: 0.0.40
codegen_flags: <defaults>
</compile_context>

<pallas_src>
import functools

import jax
import jax.numpy as jnp
from jax.experimental import pallas as pl
from jax.experimental.pallas import tpu as pltpu

_LANE = 128                              # vreg lane width
_SUBLANE = 8                             # vreg sublane height (f32)
_TARGET_TILE_BYTES = 2 * 1024 * 1024     # ~2 MiB per tile buffer


def _pick_tile(total, quantum, limit):
    """Largest t <= limit with total % t == 0 and t % quantum == 0.
    Falls back to the full extent (always a legal BlockSpec dim)."""
    if total <= limit:
        return total
    if total % quantum:
        return total
    t = (limit // quantum) * quantum
    while t >= quantum:
        if total % t == 0:
            return t
        t -= quantum
    return total


def _tiling(batch, lanes, itemsize):
    # Sublane (batch) tile: must be a multiple of 8 or the full batch.
    if batch > _SUBLANE and batch % _SUBLANE == 0:
        tb = _SUBLANE
    else:
        tb = batch
    # Lane tile: multiple of 128 dividing L (or full L), within the byte budget.
    tl_limit = max(_LANE, _TARGET_TILE_BYTES // (tb * itemsize))
    tl = _pick_tile(lanes, _LANE, tl_limit)
    return tb, tl


def _pe_kernel_eval(x_ref, w_ref, o_ref):
    # (TB, TL) + (1, TL): broadcast of the positional table along sublanes.
    o_ref[...] = (x_ref[...] + w_ref[...]).astype(o_ref.dtype)


def _pe_kernel_train(x_ref, w_ref, m_ref, o_ref):
    # m is the keep mask already scaled by 1/(1-p), in x's dtype.
    o_ref[...] = ((x_ref[...] + w_ref[...]) * m_ref[...]).astype(o_ref.dtype)


@functools.partial(jax.jit, static_argnames=("dp_rate", "training"))
def learnable_positional_encoding(x, w_pos, rng_key=None, *, dp_rate=0.2,
                                  training=False):
    """y = dropout(x + w_pos).  x: (B, S, D); w_pos: (S, D); returns (B, S, D)."""
    B, S, D = x.shape
    assert w_pos.shape == (S, D)
    L = S * D

    use_dropout = training and dp_rate > 0.0
    if use_dropout and dp_rate >= 1.0:
        # Degenerate case: everything is dropped.
        return jnp.zeros_like(x)

    tb, tl = _tiling(B, L, jnp.dtype(x.dtype).itemsize)
    grid = (L // tl, B // tb)            # lane tiles OUTER, batch tiles INNER

    # Lane-dense 2-D views (free reshapes: contiguous).
    x2 = x.reshape(B, L)
    w2 = w_pos.reshape(1, L).astype(x.dtype)

    x_spec = pl.BlockSpec((tb, tl), lambda j, i: (i, j))
    w_spec = pl.BlockSpec((1, tl), lambda j, i: (0, j))   # constant on inner axis
    m_spec = pl.BlockSpec((tb, tl), lambda j, i: (i, j))
    out_spec = pl.BlockSpec((tb, tl), lambda j, i: (i, j))

    compiler_params = pltpu.CompilerParams(
        dimension_semantics=("parallel", "parallel"),     # both axes shardable (v7x 2 TCs)
        vmem_limit_bytes=32 * 1024 * 1024,
    )
    # NOTE: x could be donated via input_output_aliases={0: 0} when the caller
    # no longer needs it; left off here because the demo reuses x for checks.

    if use_dropout:
        keep = jax.random.bernoulli(rng_key, 1.0 - dp_rate, shape=(B, S, D))
        scale = jnp.asarray(1.0 / (1.0 - dp_rate), x.dtype)
        mask2 = (keep.astype(x.dtype) * scale).reshape(B, L)
        out = pl.pallas_call(
            _pe_kernel_train,
            out_shape=jax.ShapeDtypeStruct((B, L), x.dtype),
            grid_spec=pl.GridSpec(
                grid=grid,
                in_specs=[x_spec, w_spec, m_spec],
                out_specs=out_spec,
            ),
            compiler_params=compiler_params,
        )(x2, w2, mask2)
    else:
        out = pl.pallas_call(
            _pe_kernel_eval,
            out_shape=jax.ShapeDtypeStruct((B, L), x.dtype),
            grid_spec=pl.GridSpec(
                grid=grid,
                in_specs=[x_spec, w_spec],
                out_specs=out_spec,
            ),
            compiler_params=compiler_params,
        )(x2, w2)

    return out.reshape(B, S, D)


if __name__ == "__main__":
    # Small shapes consistent with the module: batch=2, seq_len=8, d_model=32.
    B, S, D = 2, 8, 32
    key = jax.random.PRNGKey(0)
    kx, kw, kd = jax.random.split(key, 3)

    x = jax.random.normal(kx, (B, S, D), dtype=jnp.float32)
    # Deterministic init matching nn.init.uniform_(W_pos, -0.02, 0.02).
    w_pos = jax.random.uniform(kw, (S, D), dtype=jnp.float32,
                               minval=-0.02, maxval=0.02)
    ref = x + w_pos[None, :, :]

    # Eval mode: dropout is identity -> exact reference check.
    y_eval = learnable_positional_encoding(x, w_pos, dp_rate=0.2, training=False)
    y_eval = jax.block_until_ready(y_eval)
    assert jnp.allclose(y_eval, ref, atol=1e-6), "eval-mode mismatch"

    # Train mode: the keep mask is derived deterministically from kd inside the
    # wrapper; rebuild it here for an exact reference.
    p = 0.2
    y_train = learnable_positional_encoding(x, w_pos, kd, dp_rate=p, training=True)
    y_train = jax.block_until_ready(y_train)
    keep = jax.random.bernoulli(kd, 1.0 - p, shape=(B, S, D))
    ref_train = jnp.where(keep, ref * (1.0 / (1.0 - p)), 0.0)
    assert y_train.shape == (B, S, D)
    assert jnp.allclose(y_train, ref_train, atol=1e-6), "train-mode mismatch"

    print("KERNEL_OK")
</pallas_src>

<mosaic_0001>
module attributes {stable_mosaic.version = 11 : i64} {
  func.func @_pe_kernel_eval(%arg0: i32, %arg1: i32, %arg2: memref<2x256xf32, #tpu.memory_space<vmem>>, %arg3: memref<1x256xf32, #tpu.memory_space<vmem>>, %arg4: memref<2x256xf32, #tpu.memory_space<vmem>>) attributes {dimension_semantics = [#tpu.dimension_semantics<parallel>, #tpu.dimension_semantics<parallel>], iteration_bounds = array<i64: 1, 1>, scalar_prefetch = 0 : i64, scratch_operands = 0 : i64, tpu.core_type = #tpu.core_type<tc>, window_params = [{transform_indices = @transform_0, window_bounds = array<i64: 2, 256>}, {transform_indices = @transform_1, window_bounds = array<i64: 1, 256>}, {transform_indices = @transform_2, window_bounds = array<i64: 2, 256>}]} {
    %c0 = arith.constant 0 : index
    %c0_0 = arith.constant 0 : index
    %0 = vector.load %arg2[%c0, %c0_0] : memref<2x256xf32, #tpu.memory_space<vmem>>, vector<2x256xf32>
    %c0_1 = arith.constant 0 : index
    %c0_2 = arith.constant 0 : index
    %1 = vector.load %arg3[%c0_1, %c0_2] : memref<1x256xf32, #tpu.memory_space<vmem>>, vector<1x256xf32>
    %2 = vector.broadcast %1 : vector<1x256xf32> to vector<2x256xf32>
    %3 = arith.addf %0, %2 : vector<2x256xf32>
    %c0_3 = arith.constant 0 : index
    %c0_4 = arith.constant 0 : index
    %4 = vector.load %arg4[%c0_3, %c0_4] : memref<2x256xf32, #tpu.memory_space<vmem>>, vector<2x256xf32>
    tpu.vector_store %arg4[%c0_3, %c0_4], %3 {strides = array<i32>} : memref<2x256xf32, #tpu.memory_space<vmem>>, vector<2x256xf32>,
    return
  }
  func.func @transform_0(%arg0: i32, %arg1: i32) -> (i32, i32) {
    %c0_i32 = arith.constant 0 : i32
    return %arg1, %arg0 : i32, i32
  }
  func.func @transform_1(%arg0: i32, %arg1: i32) -> (i32, i32) {
    %c0_i32 = arith.constant 0 : i32
    %c0_i32_0 = arith.constant 0 : i32
    return %c0_i32, %arg0 : i32, i32
  }
  func.func @transform_2(%arg0: i32, %arg1: i32) -> (i32, i32) {
    %c0_i32 = arith.constant 0 : i32
    return %arg1, %arg0 : i32, i32
  }
}

</mosaic_0001>

<llo_original>
// kernel: learnable_positional_encoding.1
$region0: #{learnable_positional_encoding.1}
  #allocation0 [shape = 'u32[]', space=smem, size = 0x4, offset = 0x4, fixed_abs, tag = 'smem constant byte address 0x4 - core index']
  #allocation1 [shape = 'u32[72,128]{1,0:T(1,128)}', space=vmem, size = 0x9000, scoped, tag = 'internal scratch']
  %s0 = inlined_call_operand.vmem [shape: f32[2,256], index: 0, kind: input, shape index: {}]
  %s1 = inlined_call_operand.vmem [shape: f32[1,256], index: 1, kind: input, shape index: {}]
  %s2 = inlined_call_operand.vmem [shape: f32[2,256], index: 2, kind: output, shape index: {}]
  %s3 = sld [smem:[#allocation0]]
  $region18: #{learnable_positional_encoding.1} parent=0
    _
  %s5 = ssub.s32 1, %s3
  %s6 = scalar_select 0, %s5, %s3
  // Predicated region
  $region2: #{learnable_positional_encoding.1} parent=0 // pred_check
    _
  $region3: #{learnable_positional_encoding.1} parent=0 // pred_check_branch
    %8 = sbr.rel (0) target = $region5
  $region4: #{learnable_positional_encoding.1} parent=0 // pred_region
    _
  $region5: #{learnable_positional_encoding.1} parent=0 // pred_fallthru
    _
  // Predicated region
  $region6: #{learnable_positional_encoding.1} parent=0 // pred_check
    _
  $region7: #{learnable_positional_encoding.1} parent=0 // pred_check_branch
    %10 = sbr.rel (0) target = $region9
  $region8: #{learnable_positional_encoding.1} parent=0 // pred_region
    _
  $region9: #{learnable_positional_encoding.1} parent=0 // pred_fallthru
    _
  %v11 = vld [vmem:[%s0] sm:$0xf]
  %v12 = vld [vmem:[%s1] sm:$0x3]
  %v14 = vperm.slane %v12, 0
  %v15 = vperm.slane %v12, 1
  %v16 = vrot.slane %v15, 6
  %vm17 = vcmask 1041408
  %v18 = vsel %vm17, %v14, %v16
  %v20 = vadd.f32 %v11, %v18
  %21 = vst [vmem:[%s2] sm:$0xf] %v20
  // Predicated region
  $region10: #{learnable_positional_encoding.1} parent=0 // pred_check
    _
  $region11: #{learnable_positional_encoding.1} parent=0 // pred_check_branch
    %23 = sbr.rel (0) target = $region13
  $region12: #{learnable_positional_encoding.1} parent=0 // pred_region
    _
  $region13: #{learnable_positional_encoding.1} parent=0 // pred_fallthru
    _
  // Predicated region
  $region14: #{learnable_positional_encoding.1} parent=0 // pred_check
    _
  $region15: #{learnable_positional_encoding.1} parent=0 // pred_check_branch
    %25 = sbr.rel (0) target = $region17
  $region16: #{learnable_positional_encoding.1} parent=0 // pred_region
    _
  $region17: #{learnable_positional_encoding.1} parent=0 // pred_fallthru
    _

</llo_original>
